<compile_context>
chip_gen: v6e
topology: v6e:2x2x1
jax: 0.10.0
libtpu: 0.0.40
codegen_flags: <defaults>
</compile_context>

<pallas_src>
import functools

import jax
import jax.numpy as jnp
from jax.experimental import pallas as pl
from jax.experimental.pallas import tpu as pltpu

_LANE = 128


def _cdiv(a, b):
    return -(-a // b)


def _round_up(v, m):
    return _cdiv(v, m) * m


def _focal_weight(one_minus_p, gamma):
    """(1-p)^gamma: multiply chain for small integer gamma, pow otherwise."""
    g = float(gamma)
    gi = int(round(g))
    if abs(g - gi) < 1e-12 and 0 <= gi <= 8:
        if gi == 0:
            return jnp.ones_like(one_minus_p)
        acc, base, e = None, one_minus_p, gi
        while e:  # square-and-multiply, fully unrolled at trace time
            if e & 1:
                acc = base if acc is None else acc * base
            e >>= 1
            if e:
                base = base * base
        return acc
    return jnp.power(one_minus_p, g)


def _focal_kernel(x_ref, t_ref, o_ref, acc_ref, *,
                  alpha, gamma, eps, oh_eps, inv_hw, mask_invalid):
    # x_ref:   (TB, C, T) logits tile (original dtype, cast to f32 on-chip)
    # t_ref:   (TB, T) int32 class labels tile (padded pixels carry -1)
    # o_ref:   (1, TB, 128) f32 per-sample loss (written at the last spatial tile)
    # acc_ref: (TB, 1) f32 running spatial sum per sample
    j = pl.program_id(1)

    @pl.when(j == 0)
    def _init():
        acc_ref[...] = jnp.zeros_like(acc_ref)

    x = x_ref[...].astype(jnp.float32)                 # (TB, C, T)
    labels = t_ref[...]                                # (TB, T) int32

    # numerically-stable softmax over the class (sublane) axis
    m = jnp.max(x, axis=1, keepdims=True)              # (TB, 1, T)
    xm = x - m
    e = jnp.exp(xm)                                    # (TB, C, T)  EUP
    s = jnp.sum(e, axis=1, keepdims=True)              # (TB, 1, T)
    inv_s = pl.reciprocal(s, approx=False)             # EUP, narrow
    p = e * inv_s + eps                                # input_soft (for the weight)
    # log-softmax via a (TB,1,T) log instead of a full (TB,C,T) log(p+eps):
    logp = xm - jnp.log(s)                             # (TB, C, T), only VPU sub

    weight = _focal_weight(1.0 - p, gamma)             # gamma=2 -> w*w (no pow)
    focal = (-alpha) * weight * logp                   # (TB, C, T)

    # fused (one_hot + 1e-6) contraction: single class-axis reduce
    cls = jax.lax.broadcasted_iota(jnp.int32, focal.shape, 1)
    oh = (cls == labels[:, None, :]).astype(jnp.float32) + oh_eps
    loss_px = jnp.sum(focal * oh, axis=1)              # (TB, T)

    if mask_invalid:                                   # static flag: spatial padding
        loss_px = jnp.where(labels >= 0, loss_px, 0.0)

    acc_ref[...] += jnp.sum(loss_px, axis=-1, keepdims=True)   # (TB, 1)

    @pl.when(j == pl.num_programs(1) - 1)
    def _finalize():
        mean = acc_ref[...] * inv_hw                   # (TB, 1), 1/true_HW
        o_ref[...] = jnp.broadcast_to(mean[None, :, :], o_ref.shape).astype(o_ref.dtype)


# --------------------------------------------------------------------------- #
# Tile selection / VMEM accounting
# --------------------------------------------------------------------------- #

def _device_vmem_capacity():
    try:
        info = pltpu.get_tpu_info()
        cap = int(getattr(info, "vmem_capacity_bytes", 0))
        if cap > 0:
            return cap
    except Exception:
        pass
    return 64 << 20  # conservative default (v7x per-core VMEM)


def _sublane_multiple(dtype):
    itemsize = jnp.dtype(dtype).itemsize
    return max(8, 32 // max(itemsize, 1))   # 8 for f32, 16 for bf16, 32 for i8


def _estimate_vmem_bytes(tb, c, t_hw, in_dtype):
    """Padded, double-buffered VMEM footprint estimate for one grid step."""
    in_bytes = jnp.dtype(in_dtype).itemsize
    c_in = _round_up(c, _sublane_multiple(in_dtype))
    c_f32 = _round_up(c, 8)
    tb8 = _round_up(tb, 8)
    logits_in = 2 * tb * c_in * t_hw * in_bytes       # double-buffered logits block
    labels_in = 2 * tb8 * t_hw * 4                    # double-buffered int32 labels
    temps_full = 6 * tb * c_f32 * t_hw * 4            # live f32 (TB,C,T) temporaries
    temps_narrow = 4 * tb * 8 * t_hw * 4              # (TB,1,T) softmax stats
    out_blk = 2 * tb8 * _LANE * 4                     # output block (double-buffered)
    acc = tb8 * _LANE * 4                             # accumulator scratch (padded)
    return logits_in + labels_in + temps_full + temps_narrow + out_blk + acc


def _pick_tiles(n, c, hw, in_dtype, usable):
    """Pick (tb, t_hw, hw_pad) under the VMEM budget and (8,128) layout rules."""
    # Batch tile: must be a multiple of 8 (2D label block sublane rule) or == N.
    cands = sorted({d for d in range(8, n + 1, 8) if n % d == 0} | {n})
    fitting = [tb for tb in cands if _estimate_vmem_bytes(tb, c, _LANE, in_dtype) <= usable]
    if not fitting:
        tb = min(cands)
    else:
        # Prefer >= 2 batch blocks (keeps both v7x TensorCores busy), tb <= 32.
        pref = [tb for tb in fitting if tb <= 32 and n // tb >= 2]
        if pref:
            tb = max(pref)
        else:
            small = [tb for tb in fitting if tb <= 32]
            tb = max(small) if small else min(fitting)

    hw128 = _round_up(hw, _LANE)
    t_cap = min(2048, hw128)          # 512-2048 lanes already saturate the pipeline
    t_fit = _LANE
    t = _LANE
    while t <= t_cap:
        if _estimate_vmem_bytes(tb, c, t, in_dtype) <= usable:
            t_fit = t
        t += _LANE
    n_steps = _cdiv(hw128, t_fit)
    t_hw = _round_up(_cdiv(hw128, n_steps), _LANE)    # minimizes spatial padding
    hw_pad = n_steps * t_hw
    return tb, t_hw, hw_pad


# --------------------------------------------------------------------------- #
# Wrapper
# --------------------------------------------------------------------------- #

def focal_loss_pallas(logits, target, alpha, gamma=2.0, reduction="none", eps=1e-8):
    """Pallas equivalent of the kornia-style focal_loss (forward).

    logits: (N, C, *) float (f32 or bf16)
    target: (N, *) integer class ids in [0, C)
    returns: (N,) if reduction == 'none', else scalar
    """
    n, c = int(logits.shape[0]), int(logits.shape[1])
    hw = 1
    for s in logits.shape[2:]:
        hw *= int(s)

    x = logits.reshape(n, c, hw)          # keep input dtype; cast happens in-kernel
    t = target.reshape(n, hw)             # 2D labels: no size-1 sublane padding
    if t.dtype != jnp.int32:
        t = t.astype(jnp.int32)

    cap = _device_vmem_capacity()
    usable = min(int(cap * 0.55), 48 << 20)
    tb, t_hw, hw_pad = _pick_tiles(n, c, hw, x.dtype, usable)

    mask_invalid = hw_pad != hw
    if mask_invalid:                      # pad spatial axis up to a tile multiple
        x = jnp.pad(x, ((0, 0), (0, 0), (0, hw_pad - hw)))
        t = jnp.pad(t, ((0, 0), (0, hw_pad - hw)), constant_values=-1)

    n_blk = n // tb
    n_hw = hw_pad // t_hw

    est = _estimate_vmem_bytes(tb, c, t_hw, x.dtype)
    vmem_limit = int(min(max(est * 1.3 + (4 << 20), 32 << 20), int(cap * 0.8)))

    kernel = functools.partial(
        _focal_kernel,
        alpha=float(alpha),
        gamma=float(gamma),
        eps=float(eps),
        oh_eps=1e-6,                      # hard-coded default of one_hot() in the spec
        inv_hw=1.0 / float(hw),           # mean over the *true* pixel count
        mask_invalid=mask_invalid,
    )

    out = pl.pallas_call(
        kernel,
        out_shape=jax.ShapeDtypeStruct((n_blk, tb, _LANE), jnp.float32),
        grid_spec=pltpu.PrefetchScalarGridSpec(
            num_scalar_prefetch=0,
            grid=(n_blk, n_hw),
            in_specs=[
                pl.BlockSpec((tb, c, t_hw), lambda i, j: (i, 0, j)),
                pl.BlockSpec((tb, t_hw), lambda i, j: (i, j)),
            ],
            out_specs=pl.BlockSpec((1, tb, _LANE), lambda i, j: (i, 0, 0)),
            scratch_shapes=[pltpu.VMEM((tb, 1), jnp.float32)],
        ),
        compiler_params=pltpu.CompilerParams(
            dimension_semantics=("parallel", "arbitrary"),
            vmem_limit_bytes=vmem_limit,
        ),
    )(x, t)

    per_sample = out.reshape(n_blk * tb, _LANE)[:, 0]   # (N,)

    if reduction == "sum":
        return jnp.sum(per_sample)
    if reduction == "mean":
        return jnp.mean(per_sample)
    return per_sample


class FocalLoss:
    """Mirror of the PyTorch FocalLoss module (forward only)."""

    def __init__(self, alpha, gamma=2.0, reduction="none", eps=1e-8):
        self.alpha = alpha
        self.gamma = gamma
        self.reduction = reduction
        self.eps = eps

    def __call__(self, logits, target):
        return focal_loss_pallas(
            logits, target, self.alpha, self.gamma, self.reduction, self.eps)


def _reference(logits, target, alpha, gamma=2.0, eps=1e-8):
    """Pure-JAX reference matching the PyTorch semantics (reduction='none')."""
    x = logits.astype(jnp.float32)
    p = jax.nn.softmax(x, axis=1) + eps
    oh = jax.nn.one_hot(target, x.shape[1], axis=1, dtype=jnp.float32) + 1e-6
    weight = jnp.power(1.0 - p, gamma)
    focal = -alpha * weight * jnp.log(p)
    loss = jnp.sum(oh * focal, axis=1)            # (N, *)
    return jnp.mean(loss.reshape(loss.shape[0], -1), axis=1)   # (N,)


if __name__ == "__main__":
    key = jax.random.PRNGKey(0)
    k1, k2, k3, k4 = jax.random.split(key, 4)

    # Case 1: HW divisible by 128 (no spatial padding path)
    N, C, H, W = 2, 4, 16, 16
    logits = jax.random.normal(k1, (N, C, H, W), dtype=jnp.float32)
    target = jax.random.randint(k2, (N, H, W), 0, C, dtype=jnp.int32)

    loss_none = FocalLoss(alpha=0.5, gamma=2.0, reduction="none")(logits, target)
    loss_mean = FocalLoss(alpha=0.5, gamma=2.0, reduction="mean")(logits, target)
    jax.block_until_ready((loss_none, loss_mean))

    ref_none = _reference(logits, target, alpha=0.5, gamma=2.0)
    ref_mean = jnp.mean(ref_none)
    assert loss_none.shape == (N,)
    assert jnp.allclose(loss_none, ref_none, rtol=2e-5, atol=2e-6), (loss_none, ref_none)
    assert jnp.allclose(loss_mean, ref_mean, rtol=2e-5, atol=2e-6), (loss_mean, ref_mean)

    # Case 2: the docstring-style shape (HW not divisible by 128 -> padded + masked)
    N2, C2, H2, W2 = 1, 5, 3, 5
    logits2 = jax.random.normal(k3, (N2, C2, H2, W2), dtype=jnp.float32)
    target2 = jax.random.randint(k4, (N2, H2, W2), 0, C2, dtype=jnp.int32)

    loss2 = FocalLoss(alpha=0.5, gamma=2.0, reduction="mean")(logits2, target2)
    jax.block_until_ready(loss2)
    ref2 = jnp.mean(_reference(logits2, target2, alpha=0.5, gamma=2.0))
    assert jnp.allclose(loss2, ref2, rtol=2e-5, atol=2e-6), (loss2, ref2)

    print("KERNEL_OK")
</pallas_src>

<mosaic_0001>
module attributes {stable_mosaic.version = 11 : i64} {
  func.func @_focal_kernel(%arg0: i32, %arg1: i32, %arg2: memref<2x4x256xf32, #tpu.memory_space<vmem>>, %arg3: memref<2x256xi32, #tpu.memory_space<vmem>>, %arg4: memref<1x2x128xf32, #tpu.memory_space<vmem>>, %arg5: memref<2x1xf32, #tpu.memory_space<vmem>>) attributes {dimension_semantics = [#tpu.dimension_semantics<parallel>, #tpu.dimension_semantics<arbitrary>], iteration_bounds = array<i64: 1, 1>, scalar_prefetch = 0 : i64, scratch_operands = 1 : i64, tpu.core_type = #tpu.core_type<tc>, window_params = [{transform_indices = @transform_0, window_bounds = array<i64: 2, 4, 256>}, {transform_indices = @transform_1, window_bounds = array<i64: 2, 256>}, {transform_indices = @transform_2, window_bounds = array<i64: 1, 2, 128>}]} {
    %c0_i32 = arith.constant 0 : i32
    %0 = arith.cmpi eq, %arg1, %c0_i32 : i32
    %1 = arith.extui %0 : i1 to i32
    %c0_i32_0 = arith.constant 0 : i32
    %2 = arith.cmpi ne, %1, %c0_i32_0 : i32
    scf.if %2 {
      %cst_18 = arith.constant 0.000000e+00 : f32
      %44 = vector.broadcast %cst_18 : f32 to vector<2x1xf32>
      %c0_19 = arith.constant 0 : index
      %c0_20 = arith.constant 0 : index
      %45 = vector.load %arg5[%c0_19, %c0_20] : memref<2x1xf32, #tpu.memory_space<vmem>>, vector<2x1xf32>
      tpu.vector_store %arg5[%c0_19, %c0_20], %44 {strides = array<i32>} : memref<2x1xf32, #tpu.memory_space<vmem>>, vector<2x1xf32>,
    } else {
    }
    %c0 = arith.constant 0 : index
    %c0_1 = arith.constant 0 : index
    %c0_2 = arith.constant 0 : index
    %3 = vector.load %arg2[%c0, %c0_1, %c0_2] : memref<2x4x256xf32, #tpu.memory_space<vmem>>, vector<2x4x256xf32>
    %c0_3 = arith.constant 0 : index
    %c0_4 = arith.constant 0 : index
    %4 = vector.load %arg3[%c0_3, %c0_4] : memref<2x256xi32, #tpu.memory_space<vmem>>, vector<2x256xi32>
    %cst = arith.constant dense<0xFF800000> : vector<2x256xf32>
    %5 = vector.multi_reduction <maximumf>, %3, %cst [1] : vector<2x4x256xf32> to vector<2x256xf32>
    %6 = vector.shape_cast %5 : vector<2x256xf32> to vector<2x1x256xf32>
    %7 = vector.broadcast %6 : vector<2x1x256xf32> to vector<2x4x256xf32>
    %8 = arith.subf %3, %7 : vector<2x4x256xf32>
    %9 = math.exp %8 : vector<2x4x256xf32>
    %cst_5 = arith.constant dense<0.000000e+00> : vector<2x256xf32>
    %10 = vector.multi_reduction <add>, %9, %cst_5 [1] : vector<2x4x256xf32> to vector<2x256xf32>
    %11 = vector.shape_cast %10 : vector<2x256xf32> to vector<2x1x256xf32>
    %12 = tpu.reciprocal %11 : vector<2x1x256xf32> -> vector<2x1x256xf32>
    %13 = vector.broadcast %12 : vector<2x1x256xf32> to vector<2x4x256xf32>
    %14 = arith.mulf %9, %13 : vector<2x4x256xf32>
    %cst_6 = arith.constant 9.99999993E-9 : f32
    %15 = vector.broadcast %cst_6 : f32 to vector<2x4x256xf32>
    %16 = arith.addf %14, %15 : vector<2x4x256xf32>
    %17 = math.log %11 : vector<2x1x256xf32>
    %18 = vector.broadcast %17 : vector<2x1x256xf32> to vector<2x4x256xf32>
    %19 = arith.subf %8, %18 : vector<2x4x256xf32>
    %cst_7 = arith.constant 1.000000e+00 : f32
    %20 = vector.broadcast %cst_7 : f32 to vector<2x4x256xf32>
    %21 = arith.subf %20, %16 : vector<2x4x256xf32>
    %22 = arith.mulf %21, %21 : vector<2x4x256xf32>
    %cst_8 = arith.constant -5.000000e-01 : f32
    %23 = vector.broadcast %cst_8 : f32 to vector<2x4x256xf32>
    %24 = arith.mulf %23, %22 : vector<2x4x256xf32>
    %25 = arith.mulf %24, %19 : vector<2x4x256xf32>
    %26 = tpu.iota {dimensions = array<i32: 1>} : vector<2x4x256xi32>
    %27 = vector.shape_cast %4 : vector<2x256xi32> to vector<2x1x256xi32>
    %28 = vector.broadcast %27 : vector<2x1x256xi32> to vector<2x4x256xi32>
    %29 = arith.cmpi eq, %26, %28 : vector<2x4x256xi32>
    %30 = arith.extui %29 : vector<2x4x256xi1> to vector<2x4x256xi32>
    %31 = arith.sitofp %30 : vector<2x4x256xi32> to vector<2x4x256xf32>
    %cst_9 = arith.constant 9.99999997E-7 : f32
    %32 = vector.broadcast %cst_9 : f32 to vector<2x4x256xf32>
    %33 = arith.addf %31, %32 : vector<2x4x256xf32>
    %34 = arith.mulf %25, %33 : vector<2x4x256xf32>
    %cst_10 = arith.constant dense<0.000000e+00> : vector<2x256xf32>
    %35 = vector.multi_reduction <add>, %34, %cst_10 [1] : vector<2x4x256xf32> to vector<2x256xf32>
    %c0_11 = arith.constant 0 : index
    %c0_12 = arith.constant 0 : index
    %36 = vector.load %arg5[%c0_11, %c0_12] : memref<2x1xf32, #tpu.memory_space<vmem>>, vector<2x1xf32>
    %cst_13 = arith.constant dense<0.000000e+00> : vector<2xf32>
    %37 = vector.multi_reduction <add>, %35, %cst_13 [1] : vector<2x256xf32> to vector<2xf32>
    %38 = vector.shape_cast %37 : vector<2xf32> to vector<2x1xf32>
    %39 = arith.addf %36, %38 : vector<2x1xf32>
    %c0_14 = arith.constant 0 : index
    %c0_15 = arith.constant 0 : index
    %40 = vector.load %arg5[%c0_14, %c0_15] : memref<2x1xf32, #tpu.memory_space<vmem>>, vector<2x1xf32>
    tpu.vector_store %arg5[%c0_14, %c0_15], %39 {strides = array<i32>} : memref<2x1xf32, #tpu.memory_space<vmem>>, vector<2x1xf32>,
    %c0_i32_16 = arith.constant 0 : i32
    %41 = arith.cmpi eq, %arg1, %c0_i32_16 : i32
    %42 = arith.extui %41 : i1 to i32
    %c0_i32_17 = arith.constant 0 : i32
    %43 = arith.cmpi ne, %42, %c0_i32_17 : i32
    scf.if %43 {
      %c0_18 = arith.constant 0 : index
      %c0_19 = arith.constant 0 : index
      %44 = vector.load %arg5[%c0_18, %c0_19] : memref<2x1xf32, #tpu.memory_space<vmem>>, vector<2x1xf32>
      %cst_20 = arith.constant 3.906250e-03 : f32
      %45 = vector.broadcast %cst_20 : f32 to vector<2x1xf32>
      %46 = arith.mulf %44, %45 : vector<2x1xf32>
      %47 = vector.shape_cast %46 : vector<2x1xf32> to vector<1x2x1xf32>
      %48 = vector.shape_cast %47 : vector<1x2x1xf32> to vector<1x2x1xf32>
      %49 = vector.broadcast %48 : vector<1x2x1xf32> to vector<1x2x128xf32>
      %c0_21 = arith.constant 0 : index
      %c0_22 = arith.constant 0 : index
      %c0_23 = arith.constant 0 : index
      %50 = vector.load %arg4[%c0_21, %c0_22, %c0_23] : memref<1x2x128xf32, #tpu.memory_space<vmem>>, vector<1x2x128xf32>
      tpu.vector_store %arg4[%c0_21, %c0_22, %c0_23], %49 {strides = array<i32>} : memref<1x2x128xf32, #tpu.memory_space<vmem>>, vector<1x2x128xf32>,
    } else {
    }
    return
  }
  func.func @transform_0(%arg0: i32, %arg1: i32) -> (i32, i32, i32) {
    %c0_i32 = arith.constant 0 : i32
    %c0_i32_0 = arith.constant 0 : i32
    return %arg0, %c0_i32, %arg1 : i32, i32, i32
  }
  func.func @transform_1(%arg0: i32, %arg1: i32) -> (i32, i32) {
    %c0_i32 = arith.constant 0 : i32
    return %arg0, %arg1 : i32, i32
  }
  func.func @transform_2(%arg0: i32, %arg1: i32) -> (i32, i32, i32) {
    %c0_i32 = arith.constant 0 : i32
    %c0_i32_0 = arith.constant 0 : i32
    %c0_i32_1 = arith.constant 0 : i32
    return %arg0, %c0_i32, %c0_i32_0 : i32, i32, i32
  }
}

</mosaic_0001>

<llo_original>
// kernel: tpu_custom_call.1
$region0: #{tpu_custom_call.1}
  #allocation0 [shape = 'u32[]', space=smem, size = 0x4, offset = 0x4, fixed_abs, tag = 'smem constant byte address 0x4 - core index']
  #allocation1 [shape = 'u32[144,128]{1,0:T(1,128)}', space=vmem, size = 0x12000, scoped, tag = 'internal scratch']
  #allocation2 [shape = 'f32[2,1]{1,0:T(2,128)}', space=vmem, size = 0x400, scoped, tag = 'scratch operand']
  %s0 = inlined_call_operand.hbm [shape: f32[2,4,256], index: 0, kind: input, shape index: {}]
  %s1 = inlined_call_operand.hbm [shape: s32[2,256], index: 1, kind: input, shape index: {}]
  %s2 = inlined_call_operand.hbm [shape: f32[1,2,128], index: 2, kind: output, shape index: {}]
  %s3 = sld [smem:[#allocation0]]
  $region34: #{tpu_custom_call.1} parent=0
    _
  %s5 = ssub.s32 1, %s3
  %s6 = scalar_select 0, %s5, %s3
  $region1: #{tpu_custom_call.1} parent=0
    #allocation3 [shape = 'u8[8192]{0}', space=vmem, size = 0x2000, scoped, tag = 'input window, operand 0, single buffered']
    #allocation4 [shape = 's32[1]{0}', space=sflag, size = 0x4, scoped, tag = 'scoped memory for tpu_custom_call.1']
    #allocation5 [shape = 's32[1]{0}', space=sflag, size = 0x4, scoped, tag = 'scoped memory for tpu_custom_call.1']
    #allocation6 [shape = 'u8[2048]{0}', space=vmem, size = 0x800, scoped, tag = 'input window, operand 1, single buffered']
    #allocation7 [shape = 's32[1]{0}', space=sflag, size = 0x4, scoped, tag = 'scoped memory for tpu_custom_call.1']
    #allocation8 [shape = 'u8[1024]{0}', space=vmem, size = 0x400, scoped, tag = 'output window, operand 0, single buffered']
    %7 = vsyncpa [#allocation4], 0
    %8 = vsyncpa [#allocation7], 0
    %9 = vsyncpa [#allocation5], 0
    // Predicated region
    $region2: #{tpu_custom_call.1} parent=1 // pred_check
      _
    $region3: #{tpu_custom_call.1} parent=1 // pred_check_branch
      %11 = sbr.rel (0) target = $region5
    $region4: #{tpu_custom_call.1} parent=1 // pred_region
      %s13 = ssub.s32 256, 256
      %14 = vsyncadd [#allocation4], %s13
      %s15 = sshll.u32 [#allocation3], 4
      %s16 = int_to_ptr.vmem [resolvable:$true] %s15
      %21 = dma.hbm_to_vmem [thread:$0]  %s0, 256, %s16, [#allocation4], 128, 128, 8
    $region5: #{tpu_custom_call.1} parent=1 // pred_fallthru
      _
    // Predicated region
    $region6: #{tpu_custom_call.1} parent=1 // pred_check
      _
    $region7: #{tpu_custom_call.1} parent=1 // pred_check_branch
      %23 = sbr.rel (0) target = $region9
    $region8: #{tpu_custom_call.1} parent=1 // pred_region
      %s25 = ssub.s32 64, 64
      %26 = vsyncadd [#allocation7], %s25
      %s28 = sshll.u32 [#allocation6], 4
      %s29 = int_to_ptr.vmem [resolvable:$true] %s28
      %31 = dma.hbm_to_vmem [thread:$0]  %s1, 64, %s29, [#allocation7]
    $region9: #{tpu_custom_call.1} parent=1 // pred_fallthru
      _
    // Predicated region
    $region10: #{tpu_custom_call.1} parent=1 // pred_check
      _
    $region11: #{tpu_custom_call.1} parent=1 // pred_check_branch
      %33 = sbr.rel (0) target = $region13
    $region12: #{tpu_custom_call.1} parent=1 // pred_region
      %34 = dma.done [#allocation4], 256
    $region13: #{tpu_custom_call.1} parent=1 // pred_fallthru
      _
    // Predicated region
    $region14: #{tpu_custom_call.1} parent=1 // pred_check
      _
    $region15: #{tpu_custom_call.1} parent=1 // pred_check_branch
      %36 = sbr.rel (0) target = $region17
    $region16: #{tpu_custom_call.1} parent=1 // pred_region
      %37 = dma.done [#allocation7], 64
    $region17: #{tpu_custom_call.1} parent=1 // pred_fallthru
      _
    %p38 = scmp.eq.s32.totalorder 0, 0
    // Predicated region
    $region18: #{tpu_custom_call.1} parent=1 // pred_check
      %p39 = pneg %p38
    $region19: #{tpu_custom_call.1} parent=1 // pred_check_branch
      %41 = sbr.rel (%p39) target = $region21
    $region20: #{tpu_custom_call.1} parent=1 // pred_region
      %vm42 = vcmask 1024
      %43 = vst.msk [vmem:[#allocation2] sm:$0x3] %vm42, 0.0
    $region21: #{tpu_custom_call.1} parent=1 // pred_fallthru
      _
    %v44 = vld [vmem:[#allocation3] sm:$0xff]
    %v45 = vld [vmem:[#allocation3 + $0x8] sm:$0xff]
    %v46 = vld [vmem:[#allocation6] sm:$0xf]
    %v49 = vcombine.high %v44, %v44
    %v50 = vcombine.high %v45, %v45
    %vm53 = vcmask 1043456
    %v54 = vsel %vm53, %v44, -inf
    %v55 = vrot.slane %v54, 4
    %v56 = vmax.f32 %v54, %v55
    %v57 = vrot.slane %v56, 2
    %v58 = vmax.f32 %v56, %v57
    %v59 = vrot.slane %v58, 1
    %v60 = vmax.f32 %v58, %v59
    %v61 = vsel %vm53, %v49, -inf
    %v62 = vrot.slane %v61, 4
    %v63 = vmax.f32 %v61, %v62
    %v64 = vrot.slane %v63, 2
    %v65 = vmax.f32 %v63, %v64
    %v66 = vrot.slane %v65, 1
    %v67 = vmax.f32 %v65, %v66
    %v68 = vsel %vm53, %v45, -inf
    %v69 = vrot.slane %v68, 4
    %v70 = vmax.f32 %v68, %v69
    %v71 = vrot.slane %v70, 2
    %v72 = vmax.f32 %v70, %v71
    %v73 = vrot.slane %v72, 1
    %v74 = vmax.f32 %v72, %v73
    %v75 = vsel %vm53, %v50, -inf
    %v76 = vrot.slane %v75, 4
    %v77 = vmax.f32 %v75, %v76
    %v78 = vrot.slane %v77, 2
    %v79 = vmax.f32 %v77, %v78
    %v80 = vrot.slane %v79, 1
    %v81 = vmax.f32 %v79, %v80
    %v86 = vcombine.low %v60, %v67
    %v87 = vcombine.low %v74, %v81
    %v90 = vsub.f32 %v44, %v86
    %v91 = vsub.f32 %v45, %v87
    %v92 = vmul.f32 %v90, 1.442695
    %v93 = vpow.pop %v92
    %v94 = vmul.f32 %v91, 1.442695
    %v95 = vpow.pop %v94
    %v98 = vcombine.high %v93, %v93
    %v99 = vcombine.high %v95, %v95
    %v102 = vsel %vm53, %v93, 0.0
    %v103 = vrot.slane %v102, 4
    %v104 = vadd.f32 %v102, %v103
    %v105 = vrot.slane %v104, 2
    %v106 = vadd.f32 %v104, %v105
    %v107 = vrot.slane %v106, 1
    %v108 = vadd.f32 %v106, %v107
    %v109 = vsel %vm53, %v98, 0.0
    %v110 = vrot.slane %v109, 4
    %v111 = vadd.f32 %v109, %v110
    %v112 = vrot.slane %v111, 2
    %v113 = vadd.f32 %v111, %v112
    %v114 = vrot.slane %v113, 1
    %v115 = vadd.f32 %v113, %v114
    %v116 = vsel %vm53, %v95, 0.0
    %v117 = vrot.slane %v116, 4
    %v118 = vadd.f32 %v116, %v117
    %v119 = vrot.slane %v118, 2
    %v120 = vadd.f32 %v118, %v119
    %v121 = vrot.slane %v120, 1
    %v122 = vadd.f32 %v120, %v121
    %v123 = vsel %vm53, %v99, 0.0
    %v124 = vrot.slane %v123, 4
    %v125 = vadd.f32 %v123, %v124
    %v126 = vrot.slane %v125, 2
    %v127 = vadd.f32 %v125, %v126
    %v128 = vrot.slane %v127, 1
    %v129 = vadd.f32 %v127, %v128
    %v130 = vrcp.pop %v108
    %v131 = vrcp.pop %v115
    %v132 = vrcp.pop %v122
    %v133 = vrcp.pop %v129
    %v138 = vcombine.low %v130, %v131
    %v139 = vcombine.low %v132, %v133
    %v142 = vmul.f32 %v93, %v138
    %v143 = vmul.f32 %v95, %v139
    %v144 = vadd.f32 %v142, 1e-08
    %v145 = vadd.f32 %v143, 1e-08
    %v146 = vlog2.pop %v108
    %v147 = vmul.f32 %v146, 0.6931472
    %v148 = vlog2.pop %v115
    %v149 = vmul.f32 %v148, 0.6931472
    %v150 = vlog2.pop %v122
    %v151 = vmul.f32 %v150, 0.6931472
    %v152 = vlog2.pop %v129
    %v153 = vmul.f32 %v152, 0.6931472
    %v158 = vcombine.low %v147, %v149
    %v159 = vcombine.low %v151, %v153
    %v162 = vsub.f32 %v90, %v158
    %v163 = vsub.f32 %v91, %v159
    %v164 = vsub.f32 1.0, %v144
    %v165 = vsub.f32 1.0, %v145
    %v166 = vmul.f32 %v164, %v164
    %v167 = vmul.f32 %v165, %v165
    %v168 = vmul.f32 %v166, -0.5
    %v169 = vmul.f32 %v167, -0.5
    %v170 = vmul.f32 %v168, %v162
    %v171 = vmul.f32 %v169, %v163
    %v172 = vlaneseq
    %v173 = vshrl.u32 %v172, 7
    %v175 = vunpack.c.l.s4 1966171168
    %v176 = vunpack.c.0.s8 %v175
    %v177 = vlaneseq
    %v178 = vshrl.u32 %v177, 7
    %v179 = vsub.s32 %v176, %v178
    %v180 = vrot.slane %v46, %v179
    %v181 = vcombine.high %v180, %v180
    %v182 = vlaneseq
    %v183 = vshrl.u32 %v182, 7
    %v184 = vsub.s32 0, %v183
    %v185 = vrot.slane %v180, %v184
    %v186 = vlaneseq
    %v187 = vshrl.u32 %v186, 7
    %v188 = vsub.s32 1, %v187
    %v189 = vrot.slane %v180, %v188
    %v190 = vlaneseq
    %v191 = vshrl.u32 %v190, 7
    %v192 = vsub.s32 0, %v191
    %v193 = vrot.slane %v181, %v192
    %v194 = vlaneseq
    %v195 = vshrl.u32 %v194, 7
    %v196 = vsub.s32 1, %v195
    %v197 = vrot.slane %v181, %v196
    %vm198 = vcmp.eq.s32.totalorder %v173, %v185
    %vm199 = vcmp.eq.s32.totalorder %v173, %v189
    %vm200 = vcmp.eq.s32.totalorder %v173, %v193
    %vm201 = vcmp.eq.s32.totalorder %v173, %v197
    %v202 = vsel %vm198, 1, 0
    %v203 = vsel %vm199, 1, 0
    %v204 = vsel %vm200, 1, 0
    %v205 = vsel %vm201, 1, 0
    %v206 = vcvt.s32.f32 %v202
    %v207 = vcvt.s32.f32 %v203
    %v208 = vcvt.s32.f32 %v204
    %v209 = vcvt.s32.f32 %v205
    %v210 = vadd.f32 %v206, 1e-06
    %v211 = vadd.f32 %v207, 1e-06
    %v212 = vadd.f32 %v208, 1e-06
    %v213 = vadd.f32 %v209, 1e-06
    %v218 = vcombine.low %v210, %v211
    %v219 = vcombine.low %v212, %v213
    %v222 = vmul.f32 %v170, %v218
    %v223 = vmul.f32 %v171, %v219
    %v226 = vcombine.high %v222, %v222
    %v227 = vcombine.high %v223, %v223
    %v230 = vsel %vm53, %v222, 0.0
    %v231 = vrot.slane %v230, 4
    %v232 = vadd.f32 %v230, %v231
    %v233 = vrot.slane %v232, 2
    %v234 = vadd.f32 %v232, %v233
    %v235 = vrot.slane %v234, 1
    %v236 = vadd.f32 %v234, %v235
    %v237 = vsel %vm53, %v226, 0.0
    %v238 = vrot.slane %v237, 4
    %v239 = vadd.f32 %v237, %v238
    %v240 = vrot.slane %v239, 2
    %v241 = vadd.f32 %v239, %v240
    %v242 = vrot.slane %v241, 1
    %v243 = vadd.f32 %v241, %v242
    %v244 = vsel %vm53, %v223, 0.0
    %v245 = vrot.slane %v244, 4
    %v246 = vadd.f32 %v244, %v245
    %v247 = vrot.slane %v246, 2
    %v248 = vadd.f32 %v246, %v247
    %v249 = vrot.slane %v248, 1
    %v250 = vadd.f32 %v248, %v249
    %v251 = vsel %vm53, %v227, 0.0
    %v252 = vrot.slane %v251, 4
    %v253 = vadd.f32 %v251, %v252
    %v254 = vrot.slane %v253, 2
    %v255 = vadd.f32 %v253, %v254
    %v256 = vrot.slane %v255, 1
    %v257 = vadd.f32 %v255, %v256
    %v258 = vld [vmem:[#allocation2] sm:$0x3]
    %vm263 = vcmask 1041409
    %v264 = vsel %vm263, %v250, %v236
    %v265 = vsel %vm263, %v257, %v243
    %vm268 = vcmask 1041408
    %v269 = vsel %vm268, %v264, 0.0
    %v270 = vsel %vm268, %v265, 0.0
    %v271 = vadd.f32 %v269, %v270
    %272 = vadd.xlane.f32.xlu0 %v271
    %v273 = vpop.xlane.xlu0 %272
    %v274 = vadd.f32 %v258, %v273
    %vm275 = vcmask 1024
    %276 = vst.msk [vmem:[#allocation2] sm:$0x3] %vm275, %v274
    // Predicated region
    $region22: #{tpu_custom_call.1} parent=1 // pred_check
      %p277 = pneg %p38
    $region23: #{tpu_custom_call.1} parent=1 // pred_check_branch
      %279 = sbr.rel (%p277) target = $region25
    $region24: #{tpu_custom_call.1} parent=1 // pred_region
      %v280 = vld [vmem:[#allocation2] sm:$0x3]
      %v281 = vmul.f32 %v280, 0.00390625
      %283 = vset.pattern.permute.xlu0 0
      %284 = vperm.xlu0 %283, %v281
      %v285 = vpop.permute.xlu0 %284
      %287 = vst [vmem:[#allocation8] sm:$0x3] %v285
    $region25: #{tpu_custom_call.1} parent=1 // pred_fallthru
      _
    // Predicated region
    $region26: #{tpu_custom_call.1} parent=1 // pred_check
      _
    $region27: #{tpu_custom_call.1} parent=1 // pred_check_branch
      %289 = sbr.rel (0) target = $region29
    $region28: #{tpu_custom_call.1} parent=1 // pred_region
      %s291 = ssub.s32 32, 32
      %292 = vsyncadd [#allocation5], %s291
      %s294 = sshll.u32 [#allocation8], 4
      %s295 = int_to_ptr.vmem [resolvable:$true] %s294
      %297 = dma.vmem_to_hbm [thread:$0]  %s295, 32, %s2, [#allocation5]
    $region29: #{tpu_custom_call.1} parent=1 // pred_fallthru
      _
    // Predicated region
    $region30: #{tpu_custom_call.1} parent=1 // pred_check
      _
    $region31: #{tpu_custom_call.1} parent=1 // pred_check_branch
      %299 = sbr.rel (0) target = $region33
    $region32: #{tpu_custom_call.1} parent=1 // pred_region
      %300 = dma.done [#allocation5], 32
    $region33: #{tpu_custom_call.1} parent=1 // pred_fallthru
      _
    %301 = vsyncpa [#allocation4], 1
    %302 = vsyncpa [#allocation7], 1
    %303 = vsyncpa [#allocation5], 1

</llo_original>
